<compile_context>
chip_gen: v5e
topology: v5e:2x2
jax: 0.10.0
libtpu: 0.0.40
codegen_flags: <defaults>
</compile_context>

<pallas_src>
import functools

import jax
import jax.numpy as jnp
from jax.experimental import pallas as pl
from jax.experimental.pallas import tpu as pltpu

SELU_ALPHA = 1.6732632423543772
SELU_SCALE = 1.0507009873554805


def _selu(x):
    # Keep the where-form: exp overflows to inf on the discarded branch only.
    return SELU_SCALE * jnp.where(x > 0, x, SELU_ALPHA * (jnp.exp(x) - 1.0))


def _round_up(x, m):
    return -(-x // m) * m


def _extnn_kernel(x_ref, w1_ref, b1_ref, w2_ref, b2_ref, o_ref, *, apply_act2):
    # x_ref:  (tm, in_features)
    # w1_ref: (in_features, inter_features)   b1_ref: (1, inter_features)
    # w2_ref: (inter_features, out_features)  b2_ref: (1, out_features)
    # o_ref:  (tm, out_features)
    h = jnp.dot(x_ref[...], w1_ref[...], preferred_element_type=jnp.float32)
    h = _selu(h + b1_ref[...])

    y = jnp.dot(h, w2_ref[...], preferred_element_type=jnp.float32) + b2_ref[...]
    if apply_act2:
        y = _selu(y)

    o_ref[...] = y.astype(o_ref.dtype)


def prepare_extnn_params(w1, b1, w2, b2):
    """One-time parameter prep (hoisted out of the per-call path)."""
    return (w1, b1.reshape(1, -1), w2, b2.reshape(1, -1))


def extnn_mlp(x2d, w1, b1_2d, w2, b2_2d, *, apply_act2=True, tm_max=2048):
    """Runs the two-layer SELU MLP on a (M, in_features) matrix."""
    M, in_f = x2d.shape
    inter_f = w1.shape[1]
    out_f = w2.shape[1]

    # Row tile: as large as possible (amortize ~0.35 us per grid step and make
    # the input/output DMAs big), but with >= 2 balanced grid steps so both
    # v7x TensorCores get comparable work.  Multiple of 8 for sublane tiling.
    target_steps = max(2, pl.cdiv(M, tm_max))
    tm = max(8, _round_up(pl.cdiv(M, target_steps), 8))
    tm = min(tm, tm_max)
    grid = (pl.cdiv(M, tm),)

    itemsize = jnp.dtype(x2d.dtype).itemsize
    cost = pl.CostEstimate(
        flops=2 * M * (in_f * inter_f + inter_f * out_f),
        transcendentals=M * (inter_f + (out_f if apply_act2 else 0)),
        bytes_accessed=(M * in_f * itemsize            # x read
                        + M * out_f * itemsize         # y write (useful only)
                        + in_f * inter_f * 4 + inter_f * out_f * 4
                        + inter_f * 4 + out_f * 4),
    )

    kernel = functools.partial(_extnn_kernel, apply_act2=apply_act2)

    out = pl.pallas_call(
        kernel,
        out_shape=jax.ShapeDtypeStruct((M, out_f), x2d.dtype),
        grid_spec=pltpu.PrefetchScalarGridSpec(
            num_scalar_prefetch=0,
            grid=grid,
            in_specs=[
                pl.BlockSpec((tm, in_f), lambda i: (i, 0)),        # x rows
                pl.BlockSpec((in_f, inter_f), lambda i: (0, 0)),   # w1 (resident)
                pl.BlockSpec((1, inter_f), lambda i: (0, 0)),      # b1
                pl.BlockSpec((inter_f, out_f), lambda i: (0, 0)),  # w2 (resident)
                pl.BlockSpec((1, out_f), lambda i: (0, 0)),        # b2
            ],
            out_specs=pl.BlockSpec((tm, out_f), lambda i: (i, 0)),
        ),
        compiler_params=pltpu.CompilerParams(
            dimension_semantics=("parallel",)),
        cost_estimate=cost,
    )(x2d, w1, b1_2d, w2, b2_2d)

    return out


def extnn_forward(x, params, *, out_channels, out_height, out_width,
                  map_out=True, relu=True, mode="inter"):
    """JAX/Pallas equivalent of ExtNN.forward.

    x: (B, S, in_features) for mode='inter', else (B, in_features).
    `params` must come from prepare_extnn_params (biases pre-reshaped to 2-D).
    NOTE: in the PyTorch module, `relu=True` appends nn.SELU (not ReLU) after
    the second Linear; we mirror that exactly.
    """
    w1, b1_2d, w2, b2_2d = params
    out_f = out_channels * out_height * out_width

    if mode == "inter":
        B, S, in_f = x.shape
        x2d = x.reshape(B * S, in_f)
        y2d = extnn_mlp(x2d, w1, b1_2d, w2, b2_2d, apply_act2=relu)  # (B*S, out_f)
        if map_out:
            # per-slice view (-1, C, H, W), then cat along channel dim
            y = y2d.reshape(B, S, out_channels, out_height, out_width)
            return y.reshape(B, S * out_channels, out_height, out_width)
        # torch.cat of (B, out_f) slices along dim=1
        return y2d.reshape(B, S * out_f)
    else:
        y2d = extnn_mlp(x, w1, b1_2d, w2, b2_2d, apply_act2=relu)
        if map_out:
            return y2d.reshape(-1, out_channels, out_height, out_width)
        return y2d


def _reference_forward(x, params, *, out_channels, out_height, out_width,
                       relu=True):
    """Pure-JAX reference mirroring the PyTorch module (mode='inter', map)."""
    w1, b1_2d, w2, b2_2d = params
    B, S, in_f = x.shape
    h = _selu(jnp.dot(x.reshape(B * S, in_f), w1,
                      precision=jax.lax.Precision.HIGHEST) + b1_2d)
    y = jnp.dot(h, w2, precision=jax.lax.Precision.HIGHEST) + b2_2d
    if relu:
        y = _selu(y)
    y = y.reshape(B, S, out_channels, out_height, out_width)
    return y.reshape(B, S * out_channels, out_height, out_width)


if __name__ == "__main__":
    # Module config (small, consistent with the forward's expectations).
    in_features = 16
    inter_features = 10
    out_height, out_width, out_channels = 4, 4, 2
    out_features = out_height * out_width * out_channels  # 32

    key = jax.random.PRNGKey(0)
    kx, k1, k2, k3, k4, kx2 = jax.random.split(key, 6)

    # Deterministic parameter init (PyTorch-Linear-style uniform bounds).
    lim1 = 1.0 / (in_features ** 0.5)
    lim2 = 1.0 / (inter_features ** 0.5)
    w1 = jax.random.uniform(k1, (in_features, inter_features),
                            minval=-lim1, maxval=lim1, dtype=jnp.float32)
    b1 = jax.random.uniform(k2, (inter_features,),
                            minval=-lim1, maxval=lim1, dtype=jnp.float32)
    w2 = jax.random.uniform(k3, (inter_features, out_features),
                            minval=-lim2, maxval=lim2, dtype=jnp.float32)
    b2 = jax.random.uniform(k4, (out_features,),
                            minval=-lim2, maxval=lim2, dtype=jnp.float32)
    params = prepare_extnn_params(w1, b1, w2, b2)  # one-time prep

    # --- test 1: tiny input (batch=2, seq=4, in_features=16), mode='inter' ---
    x = jax.random.normal(kx, (2, 4, in_features), dtype=jnp.float32)
    out = extnn_forward(
        x, params,
        out_channels=out_channels, out_height=out_height, out_width=out_width,
        map_out=True, relu=True, mode="inter",
    )
    out = jax.block_until_ready(out)
    assert out.shape == (2, 4 * out_channels, out_height, out_width), out.shape

    ref = _reference_forward(
        x, params,
        out_channels=out_channels, out_height=out_height, out_width=out_width,
        relu=True,
    )
    assert jnp.allclose(out, ref, atol=1e-4, rtol=1e-4), \
        float(jnp.max(jnp.abs(out - ref)))

    # --- test 2: larger M (B*S = 600) exercising the balanced multi-step grid
    #             (600 rows -> tm=304, grid of 2: 304 + 296 valid rows) ---
    x_big = jax.random.normal(kx2, (4, 150, in_features), dtype=jnp.float32)
    out_big = extnn_forward(
        x_big, params,
        out_channels=out_channels, out_height=out_height, out_width=out_width,
        map_out=True, relu=True, mode="inter",
    )
    out_big = jax.block_until_ready(out_big)
    assert out_big.shape == (4, 150 * out_channels, out_height, out_width)

    ref_big = _reference_forward(
        x_big, params,
        out_channels=out_channels, out_height=out_height, out_width=out_width,
        relu=True,
    )
    assert jnp.allclose(out_big, ref_big, atol=1e-4, rtol=1e-4), \
        float(jnp.max(jnp.abs(out_big - ref_big)))

    print("KERNEL_OK")
</pallas_src>

<mosaic_0001>
module attributes {stable_mosaic.version = 11 : i64} {
  func.func @_extnn_kernel(%arg0: i32, %arg1: memref<8x16xf32, #tpu.memory_space<vmem>>, %arg2: memref<16x10xf32, #tpu.memory_space<vmem>>, %arg3: memref<1x10xf32, #tpu.memory_space<vmem>>, %arg4: memref<10x32xf32, #tpu.memory_space<vmem>>, %arg5: memref<1x32xf32, #tpu.memory_space<vmem>>, %arg6: memref<8x32xf32, #tpu.memory_space<vmem>>) attributes {dimension_semantics = [#tpu.dimension_semantics<parallel>], iteration_bounds = array<i64: 1>, scalar_prefetch = 0 : i64, scratch_operands = 0 : i64, tpu.core_type = #tpu.core_type<tc>, window_params = [{transform_indices = @transform_0, window_bounds = array<i64: 8, 16>}, {pipeline_mode = #tpu.pipeline_mode<synchronous>, transform_indices = @transform_1, window_bounds = array<i64: 16, 10>}, {pipeline_mode = #tpu.pipeline_mode<synchronous>, transform_indices = @transform_2, window_bounds = array<i64: 1, 10>}, {pipeline_mode = #tpu.pipeline_mode<synchronous>, transform_indices = @transform_3, window_bounds = array<i64: 10, 32>}, {pipeline_mode = #tpu.pipeline_mode<synchronous>, transform_indices = @transform_4, window_bounds = array<i64: 1, 32>}, {transform_indices = @transform_5, window_bounds = array<i64: 8, 32>}]} {
    %c0 = arith.constant 0 : index
    %c0_0 = arith.constant 0 : index
    %0 = vector.load %arg1[%c0, %c0_0] : memref<8x16xf32, #tpu.memory_space<vmem>>, vector<8x16xf32>
    %c0_1 = arith.constant 0 : index
    %c0_2 = arith.constant 0 : index
    %1 = vector.load %arg2[%c0_1, %c0_2] : memref<16x10xf32, #tpu.memory_space<vmem>>, vector<16x10xf32>
    %cst = arith.constant dense<0.000000e+00> : vector<8x10xf32>
    %2 = tpu.matmul %0, %1, %cst {dimension_numbers = #tpu.dot_dimension_numbers<[1], [0], [0], [1], [0, 0, 1, 1], [], []>} : vector<8x16xf32>, vector<16x10xf32>, vector<8x10xf32> -> vector<8x10xf32>
    %c0_3 = arith.constant 0 : index
    %c0_4 = arith.constant 0 : index
    %3 = vector.load %arg3[%c0_3, %c0_4] : memref<1x10xf32, #tpu.memory_space<vmem>>, vector<1x10xf32>
    %4 = vector.broadcast %3 : vector<1x10xf32> to vector<8x10xf32>
    %5 = arith.addf %2, %4 : vector<8x10xf32>
    %cst_5 = arith.constant 0.000000e+00 : f32
    %6 = vector.broadcast %cst_5 : f32 to vector<8x10xf32>
    %7 = arith.cmpf ogt, %5, %6 : vector<8x10xf32>
    %8 = math.exp %5 : vector<8x10xf32>
    %cst_6 = arith.constant 1.000000e+00 : f32
    %9 = vector.broadcast %cst_6 : f32 to vector<8x10xf32>
    %10 = arith.subf %8, %9 : vector<8x10xf32>
    %cst_7 = arith.constant 1.67326319 : f32
    %11 = vector.broadcast %cst_7 : f32 to vector<8x10xf32>
    %12 = arith.mulf %11, %10 : vector<8x10xf32>
    %13 = arith.select %7, %5, %12 : vector<8x10xi1>, vector<8x10xf32>
    %cst_8 = arith.constant 1.05070102 : f32
    %14 = vector.broadcast %cst_8 : f32 to vector<8x10xf32>
    %15 = arith.mulf %14, %13 : vector<8x10xf32>
    %c0_9 = arith.constant 0 : index
    %c0_10 = arith.constant 0 : index
    %16 = vector.load %arg4[%c0_9, %c0_10] : memref<10x32xf32, #tpu.memory_space<vmem>>, vector<10x32xf32>
    %cst_11 = arith.constant dense<0.000000e+00> : vector<8x32xf32>
    %17 = tpu.matmul %15, %16, %cst_11 {dimension_numbers = #tpu.dot_dimension_numbers<[1], [0], [0], [1], [0, 0, 1, 1], [], []>} : vector<8x10xf32>, vector<10x32xf32>, vector<8x32xf32> -> vector<8x32xf32>
    %c0_12 = arith.constant 0 : index
    %c0_13 = arith.constant 0 : index
    %18 = vector.load %arg5[%c0_12, %c0_13] : memref<1x32xf32, #tpu.memory_space<vmem>>, vector<1x32xf32>
    %19 = vector.broadcast %18 : vector<1x32xf32> to vector<8x32xf32>
    %20 = arith.addf %17, %19 : vector<8x32xf32>
    %cst_14 = arith.constant 0.000000e+00 : f32
    %21 = vector.broadcast %cst_14 : f32 to vector<8x32xf32>
    %22 = arith.cmpf ogt, %20, %21 : vector<8x32xf32>
    %23 = math.exp %20 : vector<8x32xf32>
    %cst_15 = arith.constant 1.000000e+00 : f32
    %24 = vector.broadcast %cst_15 : f32 to vector<8x32xf32>
    %25 = arith.subf %23, %24 : vector<8x32xf32>
    %cst_16 = arith.constant 1.67326319 : f32
    %26 = vector.broadcast %cst_16 : f32 to vector<8x32xf32>
    %27 = arith.mulf %26, %25 : vector<8x32xf32>
    %28 = arith.select %22, %20, %27 : vector<8x32xi1>, vector<8x32xf32>
    %cst_17 = arith.constant 1.05070102 : f32
    %29 = vector.broadcast %cst_17 : f32 to vector<8x32xf32>
    %30 = arith.mulf %29, %28 : vector<8x32xf32>
    %c0_18 = arith.constant 0 : index
    %c0_19 = arith.constant 0 : index
    %31 = vector.load %arg6[%c0_18, %c0_19] : memref<8x32xf32, #tpu.memory_space<vmem>>, vector<8x32xf32>
    tpu.vector_store %arg6[%c0_18, %c0_19], %30 {strides = array<i32>} : memref<8x32xf32, #tpu.memory_space<vmem>>, vector<8x32xf32>,
    return
  }
  func.func @transform_0(%arg0: i32) -> (i32, i32) {
    %c0_i32 = arith.constant 0 : i32
    %c0_i32_0 = arith.constant 0 : i32
    return %arg0, %c0_i32 : i32, i32
  }
  func.func @transform_1(%arg0: i32) -> (i32, i32) {
    %c0_i32 = arith.constant 0 : i32
    %c0_i32_0 = arith.constant 0 : i32
    %c0_i32_1 = arith.constant 0 : i32
    return %c0_i32, %c0_i32_0 : i32, i32
  }
  func.func @transform_2(%arg0: i32) -> (i32, i32) {
    %c0_i32 = arith.constant 0 : i32
    %c0_i32_0 = arith.constant 0 : i32
    %c0_i32_1 = arith.constant 0 : i32
    return %c0_i32, %c0_i32_0 : i32, i32
  }
  func.func @transform_3(%arg0: i32) -> (i32, i32) {
    %c0_i32 = arith.constant 0 : i32
    %c0_i32_0 = arith.constant 0 : i32
    %c0_i32_1 = arith.constant 0 : i32
    return %c0_i32, %c0_i32_0 : i32, i32
  }
  func.func @transform_4(%arg0: i32) -> (i32, i32) {
    %c0_i32 = arith.constant 0 : i32
    %c0_i32_0 = arith.constant 0 : i32
    %c0_i32_1 = arith.constant 0 : i32
    return %c0_i32, %c0_i32_0 : i32, i32
  }
  func.func @transform_5(%arg0: i32) -> (i32, i32) {
    %c0_i32 = arith.constant 0 : i32
    %c0_i32_0 = arith.constant 0 : i32
    return %arg0, %c0_i32 : i32, i32
  }
}

</mosaic_0001>

<llo_original>
// kernel: tpu_custom_call.1
$region0: #{tpu_custom_call.1}
  #allocation0 [shape = 'u32[]', space=smem, size = 0x4, offset = 0x4, fixed_abs, tag = 'smem constant byte address 0x4 - core index']
  #allocation1 [shape = 'u32[72,128]{1,0:T(1,128)}', space=vmem, size = 0x9000, scoped, tag = 'internal scratch']
  %s0 = inlined_call_operand.hbm [shape: f32[8,16], index: 0, kind: input, shape index: {}]
  %s1 = inlined_call_operand.hbm [shape: f32[16,10], index: 1, kind: input, shape index: {}]
  %s2 = inlined_call_operand.vmem [shape: f32[1,10], index: 2, kind: input, shape index: {}]
  %s3 = inlined_call_operand.hbm [shape: f32[10,32], index: 3, kind: input, shape index: {}]
  %s4 = inlined_call_operand.vmem [shape: f32[1,32], index: 4, kind: input, shape index: {}]
  %s5 = inlined_call_operand.hbm [shape: f32[8,32], index: 5, kind: output, shape index: {}]
  %s6 = sld [smem:[#allocation0]]
  $region42: #{tpu_custom_call.1} parent=0
    _
  %s8 = ssub.s32 1, %s6
  %s9 = scalar_select 0, %s8, %s6
  $region1: #{tpu_custom_call.1} parent=0
    #allocation2 [shape = 'u8[4096]{0}', space=vmem, size = 0x1000, scoped, tag = 'input window, operand 0, single buffered']
    #allocation3 [shape = 's32[1]{0}', space=sflag, size = 0x4, scoped, tag = 'scoped memory for tpu_custom_call.1']
    #allocation4 [shape = 's32[1]{0}', space=sflag, size = 0x4, scoped, tag = 'scoped memory for tpu_custom_call.1']
    #allocation5 [shape = 'u8[8192]{0}', space=vmem, size = 0x2000, scoped, tag = 'input window, operand 1, single buffered']
    #allocation6 [shape = 's32[1]{0}', space=sflag, size = 0x4, scoped, tag = 'scoped memory for tpu_custom_call.1']
    #allocation7 [shape = 'u8[8192]{0}', space=vmem, size = 0x2000, scoped, tag = 'input window, operand 3, single buffered']
    #allocation8 [shape = 'u8[4096]{0}', space=vmem, size = 0x1000, scoped, tag = 'output window, operand 0, single buffered']
    %10 = vsyncpa [#allocation3], 0
    %11 = vsyncpa [#allocation6], 0
    %12 = vsyncpa [#allocation4], 0
    // Predicated region
    $region2: #{tpu_custom_call.1} parent=1 // pred_check
      _
    $region3: #{tpu_custom_call.1} parent=1 // pred_check_branch
      %14 = sbr.rel (0) target = $region5
    $region4: #{tpu_custom_call.1} parent=1 // pred_region
      %16 = vsyncadd [#allocation3], 0
      %s18 = sshll.u32 %s0, 4
      %s19 = int_to_ptr.hbm [resolvable:$true] %s18
      %s20 = sshll.u32 [#allocation2], 4
      %s21 = int_to_ptr.vmem [resolvable:$true] %s20
      %23 = dma.hbm_to_vmem [thread:$0]  %s19, 128, %s21, [#allocation3]
    $region5: #{tpu_custom_call.1} parent=1 // pred_fallthru
      _
    // Predicated region
    $region6: #{tpu_custom_call.1} parent=1 // pred_check
      _
    $region7: #{tpu_custom_call.1} parent=1 // pred_check_branch
      %25 = sbr.rel (0) target = $region9
    $region8: #{tpu_custom_call.1} parent=1 // pred_region
      %27 = vsyncadd [#allocation6], 0
      %s28 = sshll.u32 %s1, 4
      %s29 = int_to_ptr.hbm [resolvable:$true] %s28
      %s30 = sshll.u32 [#allocation5], 4
      %s31 = int_to_ptr.vmem [resolvable:$true] %s30
      %36 = dma.hbm_to_vmem [thread:$0]  %s29, 256, %s31, [#allocation6], 128, 128, 8
    $region9: #{tpu_custom_call.1} parent=1 // pred_fallthru
      _
    // Predicated region
    $region10: #{tpu_custom_call.1} parent=1 // pred_check
      _
    $region11: #{tpu_custom_call.1} parent=1 // pred_check_branch
      %38 = sbr.rel (0) target = $region13
    $region12: #{tpu_custom_call.1} parent=1 // pred_region
      _
    $region13: #{tpu_custom_call.1} parent=1 // pred_fallthru
      _
    // Predicated region
    $region14: #{tpu_custom_call.1} parent=1 // pred_check
      _
    $region15: #{tpu_custom_call.1} parent=1 // pred_check_branch
      %40 = sbr.rel (0) target = $region17
    $region16: #{tpu_custom_call.1} parent=1 // pred_region
      %42 = vsyncadd [#allocation6], 0
      %s43 = sshll.u32 %s3, 4
      %s44 = int_to_ptr.hbm [resolvable:$true] %s43
      %s45 = sshll.u32 [#allocation7], 4
      %s46 = int_to_ptr.vmem [resolvable:$true] %s45
      %51 = dma.hbm_to_vmem [thread:$0]  %s44, 256, %s46, [#allocation6], 128, 128, 8
    $region17: #{tpu_custom_call.1} parent=1 // pred_fallthru
      _
    // Predicated region
    $region18: #{tpu_custom_call.1} parent=1 // pred_check
      _
    $region19: #{tpu_custom_call.1} parent=1 // pred_check_branch
      %53 = sbr.rel (0) target = $region21
    $region20: #{tpu_custom_call.1} parent=1 // pred_region
      _
    $region21: #{tpu_custom_call.1} parent=1 // pred_fallthru
      _
    // Predicated region
    $region22: #{tpu_custom_call.1} parent=1 // pred_check
      _
    $region23: #{tpu_custom_call.1} parent=1 // pred_check_branch
      %55 = sbr.rel (0) target = $region25
    $region24: #{tpu_custom_call.1} parent=1 // pred_region
      %57 = dma.done [#allocation3], 128
    $region25: #{tpu_custom_call.1} parent=1 // pred_fallthru
      _
    // Predicated region
    $region26: #{tpu_custom_call.1} parent=1 // pred_check
      _
    $region27: #{tpu_custom_call.1} parent=1 // pred_check_branch
      %59 = sbr.rel (0) target = $region29
    $region28: #{tpu_custom_call.1} parent=1 // pred_region
      %61 = dma.done [#allocation6], 256
    $region29: #{tpu_custom_call.1} parent=1 // pred_fallthru
      _
    // Predicated region
    $region30: #{tpu_custom_call.1} parent=1 // pred_check
      _
    $region31: #{tpu_custom_call.1} parent=1 // pred_check_branch
      %63 = sbr.rel (0) target = $region33
    $region32: #{tpu_custom_call.1} parent=1 // pred_region
      %65 = dma.done [#allocation6], 256
    $region33: #{tpu_custom_call.1} parent=1 // pred_fallthru
      _
    %v66 = vld [vmem:[#allocation2] sm:$0xff]
    %v67 = vld [vmem:[#allocation5] sm:$0xff]
    %v68 = vld [vmem:[#allocation5 + $0x8] sm:$0xff]
    %v69 = vld [vmem:[%s2] sm:$0x1]
    %v71 = vperm.slane %v69, 0
    %vm73 = vcmask 130048
    %v75 = vsel %vm73, %v66, 0
    %77 = vmatpush.msra.mxu0 0.0
    %78 = vmatpush.msra.mxu0 0.0
    %79 = vmatpush.msra.mxu0 0.0
    %80 = vmatpush.msra.mxu0 0.0
    %81 = vmatpush.msra.mxu0 0.0
    %82 = vmatpush.msra.mxu0 0.0
    %83 = vmatpush.msra.mxu0 0.0
    %84 = vmatpush.msra.mxu0 0.0
    %85 = vmatpush.msra.mxu0 0.0
    %86 = vmatpush.msra.mxu0 0.0
    %87 = vmatpush.msra.mxu0 0.0
    %88 = vmatpush.msra.mxu0 0.0
    %89 = vmatpush.msra.mxu0 0.0
    %90 = vmatpush.msra.mxu0 0.0
    %91 = vmatpush.msra.mxu0 %v68
    %92 = vmatpush.msra.mxu0 %v67
    %93 = vmatmul.f32.gmra.mxu0 %v75
    %v94 = vpop.f32.mrf.mxu0
    %v95 = vadd.f32 %v71, %v94
    %96 = vdwg.mxu0
    %vm97 = vcmp.gt.f32.partialorder %v95, 0.0
    %v98 = vmul.f32 %v95, 1.442695
    %v99 = vpow.pop %v98
    %v100 = vsub.f32 %v99, 1.0
    %v101 = vmul.f32 %v100, 1.6732632
    %v102 = vsel %vm97, %v95, %v101
    %v103 = vmul.f32 %v102, 1.050701
    %v104 = vld [vmem:[#allocation7] sm:$0xff]
    %v105 = vld [vmem:[#allocation7 + $0x8] sm:$0x3]
    %v106 = vld [vmem:[%s4] sm:$0x1]
    %v108 = vperm.slane %v106, 0
    %vm110 = vcmask 80896
    %v112 = vsel %vm110, %v103, 0
    %vm114 = vcmask 1041408
    %v116 = vsel %vm114, %v105, 0
    %118 = vmatpush.msra.mxu0 0.0
    %119 = vmatpush.msra.mxu0 0.0
    %120 = vmatpush.msra.mxu0 0.0
    %121 = vmatpush.msra.mxu0 0.0
    %122 = vmatpush.msra.mxu0 0.0
    %123 = vmatpush.msra.mxu0 0.0
    %124 = vmatpush.msra.mxu0 0.0
    %125 = vmatpush.msra.mxu0 0.0
    %126 = vmatpush.msra.mxu0 0.0
    %127 = vmatpush.msra.mxu0 0.0
    %128 = vmatpush.msra.mxu0 0.0
    %129 = vmatpush.msra.mxu0 0.0
    %130 = vmatpush.msra.mxu0 0.0
    %131 = vmatpush.msra.mxu0 0.0
    %132 = vmatpush.msra.mxu0 %v116
    %133 = vmatpush.msra.mxu0 %v104
    %134 = vmatmul.f32.gmra.mxu0 %v112
    %v135 = vpop.f32.mrf.mxu0
    %v136 = vadd.f32 %v108, %v135
    %137 = vdwg.mxu0
    %vm138 = vcmp.gt.f32.partialorder %v136, 0.0
    %v139 = vmul.f32 %v136, 1.442695
    %v140 = vpow.pop %v139
    %v141 = vsub.f32 %v140, 1.0
    %v142 = vmul.f32 %v141, 1.6732632
    %v143 = vsel %vm138, %v136, %v142
    %v144 = vmul.f32 %v143, 1.050701
    %vm145 = vcmask 261120
    %146 = vst.msk [vmem:[#allocation8] sm:$0xff] %vm145, %v144
    // Predicated region
    $region34: #{tpu_custom_call.1} parent=1 // pred_check
      _
    $region35: #{tpu_custom_call.1} parent=1 // pred_check_branch
      %148 = sbr.rel (0) target = $region37
    $region36: #{tpu_custom_call.1} parent=1 // pred_region
      %150 = vsyncadd [#allocation4], 0
      %s152 = sshll.u32 [#allocation8], 4
      %s153 = int_to_ptr.vmem [resolvable:$true] %s152
      %s154 = sshll.u32 %s5, 4
      %s155 = int_to_ptr.hbm [resolvable:$true] %s154
      %157 = dma.vmem_to_hbm [thread:$0]  %s153, 128, %s155, [#allocation4]
    $region37: #{tpu_custom_call.1} parent=1 // pred_fallthru
      _
    // Predicated region
    $region38: #{tpu_custom_call.1} parent=1 // pred_check
      _
    $region39: #{tpu_custom_call.1} parent=1 // pred_check_branch
      %159 = sbr.rel (0) target = $region41
    $region40: #{tpu_custom_call.1} parent=1 // pred_region
      %161 = dma.done [#allocation4], 128
    $region41: #{tpu_custom_call.1} parent=1 // pred_fallthru
      _
    %162 = vsyncpa [#allocation3], 1
    %163 = vsyncpa [#allocation6], 1
    %164 = vsyncpa [#allocation4], 1

</llo_original>
